<compile_context>
chip_gen: v6e
topology: v6e:2x2x1
jax: 0.10.0
libtpu: 0.0.40
codegen_flags: <defaults>
</compile_context>

<pallas_src>
import functools
import math

import jax
import jax.numpy as jnp
from jax.experimental import pallas as pl
from jax.experimental.pallas import tpu as pltpu


def _scale_kernel_n(*refs, n, inv):
    # refs = (x_0..x_{n-1}, o_0..o_{n-1}); `inv` is a trace-time Python float.
    for i in range(n):
        o = refs[n + i]
        x = refs[i][...].astype(o.dtype)  # no-op cast for float inputs
        o[...] = x * inv


def _plan(total, itemsize, n_arrays):
    """Pick (lanes, rows, tile_rows) for a flat element count `total`.

    Prefers layouts that need no padding and whose row count is a multiple of
    8 sublanes.  Tile bytes are capped so double-buffered ins+outs of all
    `n_arrays` refs fit comfortably in default scoped VMEM.
    """
    budget = 12 * 1024 * 1024  # total bytes of live double-buffered tiles
    cap_bytes = max(8 * 128 * itemsize, budget // (4 * max(1, n_arrays)))

    def try_lanes(lanes, require_sublane_aligned):
        if total % lanes:
            return None
        rows = total // lanes
        if require_sublane_aligned and rows % 8:
            return None
        cap_rows = max(8, (cap_bytes // (lanes * itemsize)) // 8 * 8)
        if rows <= cap_rows:
            # Split into two parallel grid steps when cheaply possible
            # (keeps both v7x TensorCores busy for mid-sized tensors).
            if rows >= 16 and rows % 16 == 0:
                return lanes, rows, rows // 2
            return lanes, rows, rows  # single block == full array dims
        if rows % 8:
            return None
        tr = cap_rows
        while tr >= 8 and rows % tr:
            tr -= 8
        if tr < 8:
            return None
        return lanes, rows, tr

    for aligned in (True, False):
        for lanes in (1024, 512, 256, 128):
            plan = try_lanes(lanes, aligned)
            if plan is not None:
                return plan

    # Fallback: element count not a multiple of 128 — pad to (rows, 1024).
    lanes = 1024
    cap_rows = max(8, (cap_bytes // (lanes * itemsize)) // 8 * 8)
    rows = -(-total // lanes)
    if rows <= cap_rows:
        return lanes, rows, rows
    tr = cap_rows
    rows = -(-rows // tr) * tr
    return lanes, rows, tr


def _fused_scale(xs, count):
    """Scale every array in `xs` (identical shape/dtype) by 1/count in one call."""
    n = len(xs)
    shape = xs[0].shape
    in_dtype = xs[0].dtype
    # PyTorch true division yields a floating tensor; keep float dtypes,
    # promote integer inputs to float32.
    out_dtype = in_dtype if jnp.issubdtype(in_dtype, jnp.floating) else jnp.float32
    total = max(int(math.prod(shape)), 1)
    itemsize = jnp.dtype(out_dtype).itemsize

    lanes, rows, tr = _plan(total, itemsize, n)
    padded = rows * lanes

    def prep(x):
        xf = x.reshape(-1)
        if padded != total:
            xf = jnp.pad(xf, (0, padded - total))
        return xf.reshape(rows, lanes)

    xs2 = [prep(x) for x in xs]
    grid = (rows // tr,)
    inv = 1.0 / float(count)  # compile-time constant baked into the kernel

    spec = pl.BlockSpec((tr, lanes), lambda i: (i, 0))
    outs = pl.pallas_call(
        functools.partial(_scale_kernel_n, n=n, inv=inv),
        out_shape=tuple(
            jax.ShapeDtypeStruct((rows, lanes), out_dtype) for _ in range(n)
        ),
        grid=grid,
        in_specs=[spec] * n,
        out_specs=tuple([spec] * n),
        compiler_params=pltpu.CompilerParams(
            dimension_semantics=("parallel",)),
        cost_estimate=pl.CostEstimate(
            flops=n * padded,
            transcendentals=0,
            bytes_accessed=2 * n * padded * itemsize),
    )(*xs2)

    if not isinstance(outs, (list, tuple)):
        outs = (outs,)
    return [o.reshape(-1)[:total].reshape(shape) for o in outs]


def multitask_normalization(inputs):
    """Pallas equivalent of MultitaskNormalization.forward.

    `inputs` may be a list/tuple of arrays, or a single array (iterating it
    yields dim-0 slices, matching PyTorch iteration). Returns a list.
    """
    if isinstance(inputs, (list, tuple)):
        xs = list(inputs)
        s = len(xs)
        if s == 0:
            return []
        if all(x.shape == xs[0].shape and x.dtype == xs[0].dtype for x in xs[1:]):
            # One fused pallas_call over all items — no stacking copy.
            return _fused_scale(xs, s)
        # Mixed shapes/dtypes: one lane-dense call per tensor.
        return [_fused_scale([x], s)[0] for x in xs]

    # Single tensor iterated along dim 0: dividing each slice by shape[0] is
    # identical to scaling the whole tensor once — no per-slice kernel calls.
    s = int(inputs.shape[0])
    scaled = _fused_scale([inputs], s)[0]
    return [scaled[i] for i in range(s)]


if __name__ == "__main__":
    key = jax.random.PRNGKey(0)
    k1, k2, k3 = jax.random.split(key, 3)

    # Three task inputs, NCHW layout: batch=2, channels=4, spatial=16x16.
    shape = (2, 4, 16, 16)
    inputs = [
        jax.random.normal(k1, shape, dtype=jnp.float32),
        jax.random.normal(k2, shape, dtype=jnp.float32),
        jax.random.normal(k3, shape, dtype=jnp.float32),
    ]

    outs = multitask_normalization(inputs)
    outs = [jax.block_until_ready(o) for o in outs]

    # Reference check against the exact PyTorch semantics (divide by count).
    s = len(inputs)
    ok = True
    for x, o in zip(inputs, outs):
        ref = x / s
        ok = ok and bool(jnp.allclose(o, ref, atol=1e-6, rtol=1e-6))
        ok = ok and (o.shape == x.shape) and (o.dtype == x.dtype)

    # Also exercise the single-tensor path (iteration over dim 0).
    single = inputs[0]
    souts = multitask_normalization(single)
    souts = [jax.block_until_ready(o) for o in souts]
    s2 = single.shape[0]
    for i in range(s2):
        ref = single[i] / s2
        ok = ok and bool(jnp.allclose(souts[i], ref, atol=1e-6, rtol=1e-6))

    if ok:
        print("KERNEL_OK")
    else:
        raise SystemExit("mismatch vs reference")
</pallas_src>

<mosaic_0001>
module attributes {stable_mosaic.version = 11 : i64} {
  func.func @_scale_kernel_n(%arg0: i32, %arg1: memref<8x256xf32, #tpu.memory_space<vmem>>, %arg2: memref<8x256xf32, #tpu.memory_space<vmem>>, %arg3: memref<8x256xf32, #tpu.memory_space<vmem>>, %arg4: memref<8x256xf32, #tpu.memory_space<vmem>>, %arg5: memref<8x256xf32, #tpu.memory_space<vmem>>, %arg6: memref<8x256xf32, #tpu.memory_space<vmem>>) attributes {dimension_semantics = [#tpu.dimension_semantics<parallel>], iteration_bounds = array<i64: 1>, scalar_prefetch = 0 : i64, scratch_operands = 0 : i64, tpu.core_type = #tpu.core_type<tc>, window_params = [{transform_indices = @transform_0, window_bounds = array<i64: 8, 256>}, {transform_indices = @transform_1, window_bounds = array<i64: 8, 256>}, {transform_indices = @transform_2, window_bounds = array<i64: 8, 256>}, {transform_indices = @transform_3, window_bounds = array<i64: 8, 256>}, {transform_indices = @transform_4, window_bounds = array<i64: 8, 256>}, {transform_indices = @transform_5, window_bounds = array<i64: 8, 256>}]} {
    %c0 = arith.constant 0 : index
    %c0_0 = arith.constant 0 : index
    %0 = vector.load %arg1[%c0, %c0_0] : memref<8x256xf32, #tpu.memory_space<vmem>>, vector<8x256xf32>
    %cst = arith.constant 0.333333343 : f32
    %1 = vector.broadcast %cst : f32 to vector<8x256xf32>
    %2 = arith.mulf %0, %1 : vector<8x256xf32>
    %c0_1 = arith.constant 0 : index
    %c0_2 = arith.constant 0 : index
    %3 = vector.load %arg4[%c0_1, %c0_2] : memref<8x256xf32, #tpu.memory_space<vmem>>, vector<8x256xf32>
    tpu.vector_store %arg4[%c0_1, %c0_2], %2 {strides = array<i32>} : memref<8x256xf32, #tpu.memory_space<vmem>>, vector<8x256xf32>,
    %c0_3 = arith.constant 0 : index
    %c0_4 = arith.constant 0 : index
    %4 = vector.load %arg2[%c0_3, %c0_4] : memref<8x256xf32, #tpu.memory_space<vmem>>, vector<8x256xf32>
    %cst_5 = arith.constant 0.333333343 : f32
    %5 = vector.broadcast %cst_5 : f32 to vector<8x256xf32>
    %6 = arith.mulf %4, %5 : vector<8x256xf32>
    %c0_6 = arith.constant 0 : index
    %c0_7 = arith.constant 0 : index
    %7 = vector.load %arg5[%c0_6, %c0_7] : memref<8x256xf32, #tpu.memory_space<vmem>>, vector<8x256xf32>
    tpu.vector_store %arg5[%c0_6, %c0_7], %6 {strides = array<i32>} : memref<8x256xf32, #tpu.memory_space<vmem>>, vector<8x256xf32>,
    %c0_8 = arith.constant 0 : index
    %c0_9 = arith.constant 0 : index
    %8 = vector.load %arg3[%c0_8, %c0_9] : memref<8x256xf32, #tpu.memory_space<vmem>>, vector<8x256xf32>
    %cst_10 = arith.constant 0.333333343 : f32
    %9 = vector.broadcast %cst_10 : f32 to vector<8x256xf32>
    %10 = arith.mulf %8, %9 : vector<8x256xf32>
    %c0_11 = arith.constant 0 : index
    %c0_12 = arith.constant 0 : index
    %11 = vector.load %arg6[%c0_11, %c0_12] : memref<8x256xf32, #tpu.memory_space<vmem>>, vector<8x256xf32>
    tpu.vector_store %arg6[%c0_11, %c0_12], %10 {strides = array<i32>} : memref<8x256xf32, #tpu.memory_space<vmem>>, vector<8x256xf32>,
    return
  }
  func.func @transform_0(%arg0: i32) -> (i32, i32) {
    %c0_i32 = arith.constant 0 : i32
    %c0_i32_0 = arith.constant 0 : i32
    return %arg0, %c0_i32 : i32, i32
  }
  func.func @transform_1(%arg0: i32) -> (i32, i32) {
    %c0_i32 = arith.constant 0 : i32
    %c0_i32_0 = arith.constant 0 : i32
    return %arg0, %c0_i32 : i32, i32
  }
  func.func @transform_2(%arg0: i32) -> (i32, i32) {
    %c0_i32 = arith.constant 0 : i32
    %c0_i32_0 = arith.constant 0 : i32
    return %arg0, %c0_i32 : i32, i32
  }
  func.func @transform_3(%arg0: i32) -> (i32, i32) {
    %c0_i32 = arith.constant 0 : i32
    %c0_i32_0 = arith.constant 0 : i32
    return %arg0, %c0_i32 : i32, i32
  }
  func.func @transform_4(%arg0: i32) -> (i32, i32) {
    %c0_i32 = arith.constant 0 : i32
    %c0_i32_0 = arith.constant 0 : i32
    return %arg0, %c0_i32 : i32, i32
  }
  func.func @transform_5(%arg0: i32) -> (i32, i32) {
    %c0_i32 = arith.constant 0 : i32
    %c0_i32_0 = arith.constant 0 : i32
    return %arg0, %c0_i32 : i32, i32
  }
}

</mosaic_0001>

<llo_original>
// kernel: tpu_custom_call.1
$region0: #{tpu_custom_call.1}
  #allocation0 [shape = 'u32[]', space=smem, size = 0x4, offset = 0x4, fixed_abs, tag = 'smem constant byte address 0x4 - core index']
  #allocation1 [shape = 'u32[144,128]{1,0:T(1,128)}', space=vmem, size = 0x12000, scoped, tag = 'internal scratch']
  %s0 = inlined_call_operand.hbm [shape: f32[8,256], index: 0, kind: input, shape index: {}]
  %s1 = inlined_call_operand.hbm [shape: f32[8,256], index: 1, kind: input, shape index: {}]
  %s2 = inlined_call_operand.hbm [shape: f32[8,256], index: 2, kind: input, shape index: {}]
  %s3 = inlined_call_operand.hbm [shape: f32[8,256], index: 3, kind: output, shape index: {0}]
  %s4 = inlined_call_operand.hbm [shape: f32[8,256], index: 4, kind: output, shape index: {1}]
  %s5 = inlined_call_operand.hbm [shape: f32[8,256], index: 5, kind: output, shape index: {2}]
  %6 = xla_tuple %s3, %s4, %s5
  %s7 = sld [smem:[#allocation0]]
  $region50: #{tpu_custom_call.1} parent=0
    _
  %s9 = ssub.s32 1, %s7
  %s10 = scalar_select 0, %s9, %s7
  $region1: #{tpu_custom_call.1} parent=0
    #allocation2 [shape = 'u8[8192]{0}', space=vmem, size = 0x2000, scoped, tag = 'input window, operand 0, single buffered']
    #allocation3 [shape = 's32[1]{0}', space=sflag, size = 0x4, scoped, tag = 'scoped memory for tpu_custom_call.1']
    #allocation4 [shape = 's32[1]{0}', space=sflag, size = 0x4, scoped, tag = 'scoped memory for tpu_custom_call.1']
    #allocation5 [shape = 'u8[8192]{0}', space=vmem, size = 0x2000, scoped, tag = 'input window, operand 1, single buffered']
    #allocation6 [shape = 's32[1]{0}', space=sflag, size = 0x4, scoped, tag = 'scoped memory for tpu_custom_call.1']
    #allocation7 [shape = 'u8[8192]{0}', space=vmem, size = 0x2000, scoped, tag = 'input window, operand 2, single buffered']
    #allocation8 [shape = 'u8[8192]{0}', space=vmem, size = 0x2000, scoped, tag = 'output window, operand 0, single buffered']
    #allocation9 [shape = 'u8[8192]{0}', space=vmem, size = 0x2000, scoped, tag = 'output window, operand 1, single buffered']
    #allocation10 [shape = 's32[1]{0}', space=sflag, size = 0x4, scoped, tag = 'scoped memory for tpu_custom_call.1']
    #allocation11 [shape = 'u8[8192]{0}', space=vmem, size = 0x2000, scoped, tag = 'output window, operand 2, single buffered']
    %11 = vsyncpa [#allocation3], 0
    %12 = vsyncpa [#allocation6], 0
    %13 = vsyncpa [#allocation4], 0
    %14 = vsyncpa [#allocation10], 0
    // Predicated region
    $region2: #{tpu_custom_call.1} parent=1 // pred_check
      _
    $region3: #{tpu_custom_call.1} parent=1 // pred_check_branch
      %16 = sbr.rel (0) target = $region5
    $region4: #{tpu_custom_call.1} parent=1 // pred_region
      %s18 = ssub.s32 256, 256
      %19 = vsyncadd [#allocation3], %s18
      %s21 = sshll.u32 [#allocation2], 4
      %s22 = int_to_ptr.vmem [resolvable:$true] %s21
      %24 = dma.hbm_to_vmem [thread:$0]  %s0, 256, %s22, [#allocation3]
    $region5: #{tpu_custom_call.1} parent=1 // pred_fallthru
      _
    // Predicated region
    $region6: #{tpu_custom_call.1} parent=1 // pred_check
      _
    $region7: #{tpu_custom_call.1} parent=1 // pred_check_branch
      %26 = sbr.rel (0) target = $region9
    $region8: #{tpu_custom_call.1} parent=1 // pred_region
      %s28 = ssub.s32 256, 256
      %29 = vsyncadd [#allocation6], %s28
      %s31 = sshll.u32 [#allocation5], 4
      %s32 = int_to_ptr.vmem [resolvable:$true] %s31
      %34 = dma.hbm_to_vmem [thread:$0]  %s1, 256, %s32, [#allocation6]
    $region9: #{tpu_custom_call.1} parent=1 // pred_fallthru
      _
    // Predicated region
    $region10: #{tpu_custom_call.1} parent=1 // pred_check
      _
    $region11: #{tpu_custom_call.1} parent=1 // pred_check_branch
      %36 = sbr.rel (0) target = $region13
    $region12: #{tpu_custom_call.1} parent=1 // pred_region
      %s38 = ssub.s32 256, 256
      %39 = vsyncadd [#allocation6], %s38
      %s41 = sshll.u32 [#allocation7], 4
      %s42 = int_to_ptr.vmem [resolvable:$true] %s41
      %44 = dma.hbm_to_vmem [thread:$0]  %s2, 256, %s42, [#allocation6]
    $region13: #{tpu_custom_call.1} parent=1 // pred_fallthru
      _
    // Predicated region
    $region14: #{tpu_custom_call.1} parent=1 // pred_check
      _
    $region15: #{tpu_custom_call.1} parent=1 // pred_check_branch
      %46 = sbr.rel (0) target = $region17
    $region16: #{tpu_custom_call.1} parent=1 // pred_region
      %47 = dma.done [#allocation3], 256
    $region17: #{tpu_custom_call.1} parent=1 // pred_fallthru
      _
    // Predicated region
    $region18: #{tpu_custom_call.1} parent=1 // pred_check
      _
    $region19: #{tpu_custom_call.1} parent=1 // pred_check_branch
      %49 = sbr.rel (0) target = $region21
    $region20: #{tpu_custom_call.1} parent=1 // pred_region
      %50 = dma.done [#allocation6], 256
    $region21: #{tpu_custom_call.1} parent=1 // pred_fallthru
      _
    // Predicated region
    $region22: #{tpu_custom_call.1} parent=1 // pred_check
      _
    $region23: #{tpu_custom_call.1} parent=1 // pred_check_branch
      %52 = sbr.rel (0) target = $region25
    $region24: #{tpu_custom_call.1} parent=1 // pred_region
      %53 = dma.done [#allocation6], 256
    $region25: #{tpu_custom_call.1} parent=1 // pred_fallthru
      _
    %v54 = vld [vmem:[#allocation2] sm:$0xff]
    %v55 = vld [vmem:[#allocation2 + $0x8] sm:$0xff]
    %v56 = vmul.f32 %v54, 0.33333334
    %v57 = vmul.f32 %v55, 0.33333334
    %58 = vst [vmem:[#allocation8] sm:$0xff] %v56
    %59 = vst [vmem:[#allocation8 + $0x8] sm:$0xff] %v57
    %v60 = vld [vmem:[#allocation5] sm:$0xff]
    %v61 = vld [vmem:[#allocation5 + $0x8] sm:$0xff]
    %v62 = vmul.f32 %v60, 0.33333334
    %v63 = vmul.f32 %v61, 0.33333334
    %64 = vst [vmem:[#allocation9] sm:$0xff] %v62
    %65 = vst [vmem:[#allocation9 + $0x8] sm:$0xff] %v63
    %v66 = vld [vmem:[#allocation7] sm:$0xff]
    %v67 = vld [vmem:[#allocation7 + $0x8] sm:$0xff]
    %v68 = vmul.f32 %v66, 0.33333334
    %v69 = vmul.f32 %v67, 0.33333334
    %70 = vst [vmem:[#allocation11] sm:$0xff] %v68
    %71 = vst [vmem:[#allocation11 + $0x8] sm:$0xff] %v69
    // Predicated region
    $region26: #{tpu_custom_call.1} parent=1 // pred_check
      _
    $region27: #{tpu_custom_call.1} parent=1 // pred_check_branch
      %73 = sbr.rel (0) target = $region29
    $region28: #{tpu_custom_call.1} parent=1 // pred_region
      %s75 = ssub.s32 256, 256
      %76 = vsyncadd [#allocation4], %s75
      %s78 = sshll.u32 [#allocation8], 4
      %s79 = int_to_ptr.vmem [resolvable:$true] %s78
      %81 = dma.vmem_to_hbm [thread:$0]  %s79, 256, %s3, [#allocation4]
    $region29: #{tpu_custom_call.1} parent=1 // pred_fallthru
      _
    // Predicated region
    $region30: #{tpu_custom_call.1} parent=1 // pred_check
      _
    $region31: #{tpu_custom_call.1} parent=1 // pred_check_branch
      %83 = sbr.rel (0) target = $region33
    $region32: #{tpu_custom_call.1} parent=1 // pred_region
      %s85 = ssub.s32 256, 256
      %86 = vsyncadd [#allocation10], %s85
      %s88 = sshll.u32 [#allocation9], 4
      %s89 = int_to_ptr.vmem [resolvable:$true] %s88
      %91 = dma.vmem_to_hbm [thread:$0]  %s89, 256, %s4, [#allocation10]
    $region33: #{tpu_custom_call.1} parent=1 // pred_fallthru
      _
    // Predicated region
    $region34: #{tpu_custom_call.1} parent=1 // pred_check
      _
    $region35: #{tpu_custom_call.1} parent=1 // pred_check_branch
      %93 = sbr.rel (0) target = $region37
    $region36: #{tpu_custom_call.1} parent=1 // pred_region
      %s95 = ssub.s32 256, 256
      %96 = vsyncadd [#allocation10], %s95
      %s98 = sshll.u32 [#allocation11], 4
      %s99 = int_to_ptr.vmem [resolvable:$true] %s98
      %101 = dma.vmem_to_hbm [thread:$0]  %s99, 256, %s5, [#allocation10]
    $region37: #{tpu_custom_call.1} parent=1 // pred_fallthru
      _
    // Predicated region
    $region38: #{tpu_custom_call.1} parent=1 // pred_check
      _
    $region39: #{tpu_custom_call.1} parent=1 // pred_check_branch
      %103 = sbr.rel (0) target = $region41
    $region40: #{tpu_custom_call.1} parent=1 // pred_region
      %104 = dma.done [#allocation4], 256
    $region41: #{tpu_custom_call.1} parent=1 // pred_fallthru
      _
    // Predicated region
    $region42: #{tpu_custom_call.1} parent=1 // pred_check
      _
    $region43: #{tpu_custom_call.1} parent=1 // pred_check_branch
      %106 = sbr.rel (0) target = $region45
    $region44: #{tpu_custom_call.1} parent=1 // pred_region
      %107 = dma.done [#allocation10], 256
    $region45: #{tpu_custom_call.1} parent=1 // pred_fallthru
      _
    // Predicated region
    $region46: #{tpu_custom_call.1} parent=1 // pred_check
      _
    $region47: #{tpu_custom_call.1} parent=1 // pred_check_branch
      %109 = sbr.rel (0) target = $region49
    $region48: #{tpu_custom_call.1} parent=1 // pred_region
      %110 = dma.done [#allocation10], 256
    $region49: #{tpu_custom_call.1} parent=1 // pred_fallthru
      _
    %111 = vsyncpa [#allocation3], 1
    %112 = vsyncpa [#allocation6], 1
    %113 = vsyncpa [#allocation4], 1
    %114 = vsyncpa [#allocation10], 1

</llo_original>
